<compile_context>
chip_gen: v7x
topology: tpu7x:2x2x1
jax: 0.10.0
libtpu: 0.0.40
codegen_flags: <defaults>
</compile_context>

<pallas_src>
import jax
import jax.numpy as jnp
from jax.experimental import pallas as pl
from jax.experimental.pallas import tpu as pltpu


def _affine_drop_path_kernel(drop_ref, scale_ref, x_ref, o_ref):
    """out[c, t] = x[c, t] * scale[c] * drop_mult[b]   (b = grid axis 0)

    drop_ref : (B,)      f32 SMEM  per-sample keep_mask / keep_prob
    scale_ref: (Cb, 1)   f32 VMEM  per-channel scale tile
    x_ref    : (Cb, Tb)            input tile  (batch dim squeezed)
    o_ref    : (Cb, Tb)            output tile
    """
    b = pl.program_id(0)
    # Tiny (Cb, 1) factor in f32, cast once so the big tile multiply runs in
    # the input dtype; broadcasts along the lane (T) dim on the VPU.
    factor = (scale_ref[...] * drop_ref[b]).astype(x_ref.dtype)   # (Cb, 1)
    o_ref[...] = x_ref[...] * factor


def _pick_blocks(C, T, itemsize):
    """Dtype-aware (Cb, Tb) block selection, ~<= 2 MiB per block."""
    LANE = 128
    sub = {4: 8, 2: 16, 1: 32}.get(itemsize, 8)

    # Lane (last) dim: multiple of 128 (or full T when T < 128); keep it wide
    # so output stores hit the unmasked vst path.
    if T >= LANE:
        t_blk = min((T // LANE) * LANE, 2048)
    else:
        t_blk = T

    # Sublane (channel) dim: multiple of the dtype's sublane pack (or full C
    # when C is smaller), capped so one block stays around 2 MiB.
    target_bytes = 2 * 1024 * 1024
    if C >= sub:
        max_c = max(sub, target_bytes // max(t_blk * itemsize, 1))
        c_blk = min((C // sub) * sub, (max_c // sub) * sub)
        c_blk = max(c_blk, sub)
    else:
        c_blk = C
    return c_blk, t_blk


def affine_drop_path_forward(x, scale, drop_prob=0.0, *, training=False,
                             rng_key=None):
    """Pallas forward for AffineDropPath.

    x     : (B, C, T) float array
    scale : (1, C, 1) (or (C,)) per-channel scale parameter
    """
    assert x.ndim == 3, "AffineDropPath expects (B, num_dim, T) input"
    B, C, T = x.shape

    scale2d = jnp.asarray(scale, dtype=jnp.float32).reshape(C, 1)

    # Per-sample multiplier: floor(keep + U[0,1)) / keep in training, 1 in eval.
    if training and drop_prob > 0.0:
        if rng_key is None:
            rng_key = jax.random.PRNGKey(0)
        keep = 1.0 - float(drop_prob)
        u = jax.random.uniform(rng_key, (B,), dtype=jnp.float32)
        drop_mult = jnp.floor(keep + u) / keep
    else:
        drop_mult = jnp.ones((B,), dtype=jnp.float32)

    c_blk, t_blk = _pick_blocks(C, T, x.dtype.itemsize)
    grid = (B, pl.cdiv(C, c_blk), pl.cdiv(T, t_blk))

    return pl.pallas_call(
        _affine_drop_path_kernel,
        out_shape=jax.ShapeDtypeStruct((B, C, T), x.dtype),
        grid=grid,
        in_specs=[
            pl.BlockSpec(memory_space=pltpu.SMEM),                    # drop_mult (B,)
            pl.BlockSpec((c_blk, 1), lambda b, ci, ti: (ci, 0)),      # scale (C, 1)
            pl.BlockSpec((None, c_blk, t_blk),                        # x (batch squeezed)
                         lambda b, ci, ti: (b, ci, ti)),
        ],
        out_specs=pl.BlockSpec((None, c_blk, t_blk),
                               lambda b, ci, ti: (b, ci, ti)),
        compiler_params=pltpu.CompilerParams(
            dimension_semantics=("parallel", "parallel", "parallel")),
    )(drop_mult, scale2d, x)


class AffineDropPathPallas:
    """JAX/Pallas equivalent of the PyTorch `AffineDropPath` module."""

    def __init__(self, num_dim, drop_prob=0.0, init_scale_value=1e-4):
        self.scale = jnp.full((1, num_dim, 1), init_scale_value, dtype=jnp.float32)
        self.drop_prob = float(drop_prob)
        self.training = False  # PyTorch-style train/eval flag

    def __call__(self, x, rng_key=None):
        return affine_drop_path_forward(
            x, self.scale, self.drop_prob,
            training=self.training, rng_key=rng_key)


# TODO(synk): callers use this as `x + AffineDropPath(...)(y)`; the residual
# add could be fused as an extra input block, but it is outside this module.

if __name__ == "__main__":
    key = jax.random.PRNGKey(0)
    kx, kd, kr = jax.random.split(key, 3)

    B, C, T = 2, 32, 256   # (batch, num_dim, seq) — matches (1, num_dim, 1) scale
    x = jax.random.normal(kx, (B, C, T), dtype=jnp.float32)

    mod = AffineDropPathPallas(num_dim=C, drop_prob=0.1, init_scale_value=1e-4)

    # --- eval / inference path: drop is identity, out = scale * x ---
    out = jax.block_until_ready(mod(x))
    ref = x * mod.scale.astype(x.dtype)
    assert out.shape == x.shape and out.dtype == x.dtype
    assert jnp.allclose(out, ref, rtol=1e-6, atol=1e-6)

    # --- training path: per-sample stochastic depth with 1/keep rescale ---
    mod.training = True
    out_t = jax.block_until_ready(mod(x, rng_key=kd))
    keep = 1.0 - mod.drop_prob
    mask = jnp.floor(keep + jax.random.uniform(kd, (B,), dtype=jnp.float32))
    ref_t = x * mod.scale.astype(x.dtype) * (mask / keep)[:, None, None].astype(x.dtype)
    assert jnp.allclose(out_t, ref_t, rtol=1e-5, atol=1e-6)

    # --- bf16 smoke check (exercises dtype-aware sublane blocking) ---
    mod.training = False
    xb = x.astype(jnp.bfloat16)
    out_b = jax.block_until_ready(mod(xb))
    ref_b = xb * mod.scale.astype(jnp.bfloat16)
    assert out_b.dtype == jnp.bfloat16
    assert jnp.allclose(out_b.astype(jnp.float32), ref_b.astype(jnp.float32),
                        rtol=2e-2, atol=1e-6)

    # --- ragged shape check (partial C / T blocks are handled by Pallas) ---
    mod_r = AffineDropPathPallas(num_dim=20, drop_prob=0.0, init_scale_value=1e-4)
    xr = jax.random.normal(kr, (3, 20, 200), dtype=jnp.float32)
    out_r = jax.block_until_ready(mod_r(xr))
    ref_r = xr * mod_r.scale.astype(xr.dtype)
    assert jnp.allclose(out_r, ref_r, rtol=1e-6, atol=1e-6)

    print("KERNEL_OK")
</pallas_src>

<mosaic_0001>
module attributes {stable_mosaic.version = 11 : i64} {
  func.func @_affine_drop_path_kernel(%arg0: i32, %arg1: i32, %arg2: i32, %arg3: memref<2xf32, #tpu.memory_space<smem>>, %arg4: memref<32x1xf32, #tpu.memory_space<vmem>>, %arg5: memref<1x32x256xf32, #tpu.memory_space<vmem>>, %arg6: memref<1x32x256xf32, #tpu.memory_space<vmem>>) attributes {dimension_semantics = [#tpu.dimension_semantics<parallel>, #tpu.dimension_semantics<parallel>, #tpu.dimension_semantics<parallel>], iteration_bounds = array<i64: 2, 1, 1>, scalar_prefetch = 0 : i64, scratch_operands = 0 : i64, tpu.core_type = #tpu.core_type<tc>, window_params = [{transform_indices = @transform_0, window_bounds = array<i64: 2>}, {transform_indices = @transform_1, window_bounds = array<i64: 32, 1>}, {transform_indices = @transform_2, window_bounds = array<i64: 1, 32, 256>}, {transform_indices = @transform_3, window_bounds = array<i64: 1, 32, 256>}]} {
    %c0 = arith.constant 0 : index
    %c0_0 = arith.constant 0 : index
    %0 = vector.load %arg4[%c0, %c0_0] : memref<32x1xf32, #tpu.memory_space<vmem>>, vector<32x1xf32>
    %1 = arith.index_cast %arg0 : i32 to index
    %2 = memref.load %arg3[%1] : memref<2xf32, #tpu.memory_space<smem>>
    %3 = vector.broadcast %2 : f32 to vector<32x1xf32>
    %4 = arith.mulf %0, %3 : vector<32x1xf32>
    %c0_1 = arith.constant 0 : index
    %c0_2 = arith.constant 0 : index
    %c0_3 = arith.constant 0 : index
    %5 = vector.load %arg5[%c0_1, %c0_2, %c0_3] : memref<1x32x256xf32, #tpu.memory_space<vmem>>, vector<1x32x256xf32>
    %6 = vector.shape_cast %5 : vector<1x32x256xf32> to vector<32x256xf32>
    %7 = vector.broadcast %4 : vector<32x1xf32> to vector<32x256xf32>
    %8 = arith.mulf %6, %7 : vector<32x256xf32>
    %c0_4 = arith.constant 0 : index
    %c0_5 = arith.constant 0 : index
    %c0_6 = arith.constant 0 : index
    %9 = vector.load %arg6[%c0_4, %c0_5, %c0_6] : memref<1x32x256xf32, #tpu.memory_space<vmem>>, vector<1x32x256xf32>
    %10 = vector.shape_cast %9 : vector<1x32x256xf32> to vector<32x256xf32>
    %11 = vector.shape_cast %8 : vector<32x256xf32> to vector<1x32x256xf32>
    tpu.vector_store %arg6[%c0_4, %c0_5, %c0_6], %11 {strides = array<i32>} : memref<1x32x256xf32, #tpu.memory_space<vmem>>, vector<1x32x256xf32>,
    return
  }
  func.func @transform_0(%arg0: i32, %arg1: i32, %arg2: i32) -> i32 {
    %c0_i32 = arith.constant 0 : i32
    %c0_i32_0 = arith.constant 0 : i32
    return %c0_i32 : i32
  }
  func.func @transform_1(%arg0: i32, %arg1: i32, %arg2: i32) -> (i32, i32) {
    %c0_i32 = arith.constant 0 : i32
    %c0_i32_0 = arith.constant 0 : i32
    return %arg1, %c0_i32 : i32, i32
  }
  func.func @transform_2(%arg0: i32, %arg1: i32, %arg2: i32) -> (i32, i32, i32) {
    %c0_i32 = arith.constant 0 : i32
    return %arg0, %arg1, %arg2 : i32, i32, i32
  }
  func.func @transform_3(%arg0: i32, %arg1: i32, %arg2: i32) -> (i32, i32, i32) {
    %c0_i32 = arith.constant 0 : i32
    return %arg0, %arg1, %arg2 : i32, i32, i32
  }
}

</mosaic_0001>

<llo_original>
// kernel: tpu_custom_call.1
$region0: #{tpu_custom_call.1}
  #allocation0 [shape = 'u32[]', space=smem, size = 0x4, offset = 0x4, fixed_abs, tag = 'smem constant byte address 0x4 - core index']
  #allocation1 [shape = 'u32[144,128]{1,0:T(1,128)}', space=vmem, size = 0x12000, scoped, tag = 'internal scratch']
  %s0 = inlined_call_operand.vmem [shape: f32[2], index: 0, kind: input, shape index: {}]
  %s1 = inlined_call_operand.vmem [shape: f32[32,1], index: 1, kind: input, shape index: {}]
  %s2 = inlined_call_operand.hbm [shape: f32[2,32,256], index: 2, kind: input, shape index: {}]
  %s3 = inlined_call_operand.hbm [shape: f32[2,32,256], index: 3, kind: output, shape index: {}]
  %s4 = sld [smem:[#allocation0]]
  $region53: #{tpu_custom_call.1} parent=0
    _
  %s6 = ssub.s32 1, %s4
  %s7 = scalar_select 0, %s6, %s4
  $region1: #{tpu_custom_call.1} parent=0
    #allocation2 [shape = 'u8[512]{0}', space=smem, size = 0x200, scoped, tag = 'input window, operand 0, single buffered']
    #allocation3 [shape = 's32[2]{0}', space=sflag, size = 0x8, scoped, tag = 'scoped memory for tpu_custom_call.1']
    #allocation4 [shape = 's32[2]{0}', space=sflag, size = 0x8, scoped, tag = 'scoped memory for tpu_custom_call.1']
    #allocation5 [shape = 's32[2]{0}', space=sflag, size = 0x8, scoped, tag = 'scoped memory for tpu_custom_call.1']
    #allocation6 [shape = 'u8[65536]{0}', space=vmem, size = 0x10000, scoped, tag = 'input window, operand 2']
    #allocation7 [shape = 'u8[65536]{0}', space=vmem, size = 0x10000, scoped, tag = 'output window, operand 0']
    %8 = vsyncpa [#allocation5], 0
    %9 = vsyncpa [#allocation3], 0
    %s10 = scalar_lea.sflag [#allocation3], 1
    %11 = vsyncpa %s10, 0
    %12 = vsyncpa [#allocation4], 0
    %s13 = scalar_lea.sflag [#allocation4], 1
    %14 = vsyncpa %s13, 0
    loop: start=0, step=1, limit=4
    $region2: #{tpu_custom_call.1} parent=1 // loop_pre_header
      _
    $region3: #{tpu_custom_call.1} parent=1 // loop_header
      %s16 = sphi 0, %s20
      %p17 = scmp.ge.s32.totalorder %s16, 4
      %s23 = sphi 0, %s42
      %s24 = sphi 0, %s38
      %s25 = sphi 0, %s34
      %s26 = sphi 0, %s23
      %s27 = sphi 0, %s24
      %s28 = sphi 0, %s25
      %s29 = sphi 0, %s26
      %s30 = sphi 0, %s27
      %s31 = sphi 0, %s28
      %s43 = sphi 0, %s43
      %s45 = sphi 0, %s43
      %s46 = sphi 0, %s45
      %s60 = sphi 0, %s46
      %s66 = sphi 0, %s68
      %s69 = sphi 0, %s66
      %s70 = sphi 0, %s69
      %s86 = sphi 0, %s70
      %s96 = sphi 0, %s98
      %s99 = sphi 0, %s96
      %s100 = sphi 0, %s99
      %s116 = sphi 0, %s100
      %s126 = sphi 0, %s128
      %s129 = sphi 0, %s126
      %s130 = sphi 0, %s129
      %s146 = sphi 0, %s130
    $region4: #{tpu_custom_call.1} parent=1 // loop_header_branch
      %19 = sbr.rel (%p17) target = $region8
    $region5: #{tpu_custom_call.1} parent=1 // loop_body
      %s21 = ssub.s32 %s16, 1
      %s22 = ssub.s32 %s16, 2
      %s32 = sadd.s32 1, %s25
      %p33 = scmp.ge.s32.totalorder %s32, 1
      %s34 = scalar_select %p33, 0, %s32
      %s35 = sadd.s32 1, %s24
      %s36 = scalar_select %p33, %s35, %s24
      %p37 = scmp.ge.s32.totalorder %s36, 1
      %s38 = scalar_select %p37, 0, %s36
      %s39 = sadd.s32 1, %s23
      %s40 = scalar_select %p37, %s39, %s23
      %p41 = scmp.ge.s32.totalorder %s40, 2
      %s42 = scalar_select %p41, 0, %s40
      %s44 = sadd.s32 %s43, 1
      %p47 = scmp.eq.s32.totalorder %s16, 1
      %p48 = scmp.ne.s32.totalorder %s43, %s45
      %p49 = scmp.eq.s32.totalorder %s16, 0
      %p50 = por %p48, %p49
      %p51 = scmp.ne.s32.totalorder %s43, %s45
      %p52 = scmp.eq.s32.totalorder %s21, 1
      %p53 = por %p51, %p52
      %p54 = scmp.ne.s32.totalorder %s45, %s46
      %p55 = scmp.eq.s32.totalorder %s21, 0
      %p56 = por %p54, %p55
      %p57 = scmp.ne.s32.totalorder %s45, %s46
      %p58 = scmp.eq.s32.totalorder %s22, 1
      %p59 = por %p57, %p58
      %p61 = scmp.ne.s32.totalorder %s46, %s60
      %p62 = scmp.eq.s32.totalorder %s22, 0
      %p63 = por %p61, %p62
      %s64 = ssub.s32 %s24, %s38
      %p65 = scmp.eq.s32.totalorder %s64, 0
      %s67 = sadd.s32 %s66, 1
      %s68 = scalar_select %p65, %s66, %s67
      %p71 = pneg %p65
      %p72 = scmp.eq.s32.totalorder %s16, 1
      %p73 = por %p71, %p72
      %p74 = scmp.ne.s32.totalorder %s66, %s69
      %p75 = scmp.eq.s32.totalorder %s16, 0
      %p76 = por %p74, %p75
      %p77 = scmp.ne.s32.totalorder %s66, %s69
      %p78 = scmp.eq.s32.totalorder %s21, 1
      %p79 = por %p77, %p78
      %p80 = scmp.ne.s32.totalorder %s69, %s70
      %p81 = scmp.eq.s32.totalorder %s21, 0
      %p82 = por %p80, %p81
      %p83 = scmp.ne.s32.totalorder %s69, %s70
      %p84 = scmp.eq.s32.totalorder %s22, 1
      %p85 = por %p83, %p84
      %p87 = scmp.ne.s32.totalorder %s70, %s86
      %p88 = scmp.eq.s32.totalorder %s22, 0
      %p89 = por %p87, %p88
      %s90 = ssub.s32 %s23, %s42
      %s91 = ssub.s32 %s24, %s38
      %s92 = sor.u32 %s90, %s91
      %s93 = ssub.s32 %s25, %s34
      %s94 = sor.u32 %s92, %s93
      %p95 = scmp.eq.s32.totalorder %s94, 0
      %s97 = sadd.s32 %s96, 1
      %s98 = scalar_select %p95, %s96, %s97
      %p101 = pneg %p95
      %p102 = scmp.eq.s32.totalorder %s16, 1
      %p103 = por %p101, %p102
      %p104 = scmp.ne.s32.totalorder %s96, %s99
      %p105 = scmp.eq.s32.totalorder %s16, 0
      %p106 = por %p104, %p105
      %p107 = scmp.ne.s32.totalorder %s96, %s99
      %p108 = scmp.eq.s32.totalorder %s21, 1
      %p109 = por %p107, %p108
      %p110 = scmp.ne.s32.totalorder %s99, %s100
      %p111 = scmp.eq.s32.totalorder %s21, 0
      %p112 = por %p110, %p111
      %p113 = scmp.ne.s32.totalorder %s99, %s100
      %p114 = scmp.eq.s32.totalorder %s22, 1
      %p115 = por %p113, %p114
      %p117 = scmp.ne.s32.totalorder %s100, %s116
      %p118 = scmp.eq.s32.totalorder %s22, 0
      %p119 = por %p117, %p118
      %s120 = ssub.s32 %s23, %s42
      %s121 = ssub.s32 %s24, %s38
      %s122 = sor.u32 %s120, %s121
      %s123 = ssub.s32 %s25, %s34
      %s124 = sor.u32 %s122, %s123
      %p125 = scmp.eq.s32.totalorder %s124, 0
      %s127 = sadd.s32 %s126, 1
      %s128 = scalar_select %p125, %s126, %s127
      %p131 = pneg %p125
      %p132 = scmp.eq.s32.totalorder %s16, 1
      %p133 = por %p131, %p132
      %p134 = scmp.ne.s32.totalorder %s126, %s129
      %p135 = scmp.eq.s32.totalorder %s16, 0
      %p136 = por %p134, %p135
      %p137 = scmp.ne.s32.totalorder %s126, %s129
      %p138 = scmp.eq.s32.totalorder %s21, 1
      %p139 = por %p137, %p138
      %p140 = scmp.ne.s32.totalorder %s129, %s130
      %p141 = scmp.eq.s32.totalorder %s21, 0
      %p142 = por %p140, %p141
      %p143 = scmp.ne.s32.totalorder %s129, %s130
      %p144 = scmp.eq.s32.totalorder %s22, 1
      %p145 = por %p143, %p144
      %p147 = scmp.ne.s32.totalorder %s130, %s146
      %p148 = scmp.eq.s32.totalorder %s22, 0
      %p149 = por %p147, %p148
      %p150 = scmp.le.s32.totalorder 1, %s16
      %p151 = scmp.lt.s32.totalorder %s16, 3
      %p152 = pnand %p150, %p151
      %p153 = pneg %p152
      // Predicated region
      $region9: #{tpu_custom_call.1} parent=5 // pred_check
        _
      $region10: #{tpu_custom_call.1} parent=5 // pred_check_branch
        %155 = sbr.rel (%p152) target = $region12
      $region11: #{tpu_custom_call.1} parent=5 // pred_region
        %s156 = ssub.s32 %s16, 1
        // Predicated region
        $region13: #{tpu_custom_call.1} parent=11 // pred_check
          %p157 = pneg %p56
        $region14: #{tpu_custom_call.1} parent=11 // pred_check_branch
          %159 = sbr.rel (%p157) target = $region16
        $region15: #{tpu_custom_call.1} parent=11 // pred_region
          %s161 = ssub.s32 16, 16
          %162 = vsyncadd [#allocation5], %s161
          %s164 = sshll.u32 %s0, 4
          %s165 = int_to_ptr.vmem [resolvable:$true] %s164
          %167 = dma.vmem_to_smem %s165, 16, [#allocation2], [#allocation5]
        $region16: #{tpu_custom_call.1} parent=11 // pred_fallthru
          _
        // Predicated region
        $region17: #{tpu_custom_call.1} parent=11 // pred_check
          %p168 = pneg %p82
        $region18: #{tpu_custom_call.1} parent=11 // pred_check_branch
          %170 = sbr.rel (%p168) target = $region20
        $region19: #{tpu_custom_call.1} parent=11 // pred_region
          %s171 = smul.u32 4, %s27
          %p172 = scmp.lt.s32.totalorder %s171, 3
          %s173 = scalar_select %p172, %s171, 3
          %s174 = smul.addr %s173, 8
          %s175 = scalar_lea.vmem %s1, %s174
          %s176 = smul.u32 4, %s27
        $region20: #{tpu_custom_call.1} parent=11 // pred_fallthru
          _
      $region12: #{tpu_custom_call.1} parent=5 // pred_fallthru
        _
      %p177 = scmp.lt.s32.totalorder %s16, 2
      // Predicated region
      $region21: #{tpu_custom_call.1} parent=5 // pred_check
        %p178 = pneg %p177
      $region22: #{tpu_custom_call.1} parent=5 // pred_check_branch
        %180 = sbr.rel (%p178) target = $region24
      $region23: #{tpu_custom_call.1} parent=5 // pred_region
        // Predicated region
        $region25: #{tpu_custom_call.1} parent=23 // pred_check
          %p181 = pneg %p106
        $region26: #{tpu_custom_call.1} parent=23 // pred_check_branch
          %183 = sbr.rel (%p181) target = $region28
        $region27: #{tpu_custom_call.1} parent=23 // pred_region
          %s184 = sand.u32 %s96, 1
          %s185 = scalar_lea.sflag [#allocation3], %s184
          %s186 = sand.u32 %s96, 1
          %s187 = smul.addr %s186, 64
          %s188 = scalar_lea.vmem [#allocation6], %s187
          %s189 = smul.u32 4, %s24
          %s190 = smul.u32 2, %s25
          %s192 = ssub.s32 1024, 1024
          %193 = vsyncadd %s185, %s192
          %s194 = smul.addr %s189, 2
          %s195 = sadd.s32 %s190, %s194
          %s196 = smul.addr %s23, 8
          %s197 = sadd.s32 %s195, %s196
          %s198 = smul.addr %s197, 128
          %s199 = scalar_lea.hbm %s2, %s198
          %s200 = sshll.u32 %s188, 4
          %s201 = int_to_ptr.vmem [resolvable:$true] %s200
          %206 = dma.hbm_to_vmem [thread:$0]  %s199, 1024, %s201, %s185, 256, 256, 16
        $region28: #{tpu_custom_call.1} parent=23 // pred_fallthru
          _
      $region24: #{tpu_custom_call.1} parent=5 // pred_fallthru
        _
      %p207 = scmp.le.s32.totalorder 1, %s16
      %p208 = scmp.lt.s32.totalorder %s16, 3
      %p209 = pnand %p207, %p208
      %p210 = pneg %p209
      // Predicated region
      $region29: #{tpu_custom_call.1} parent=5 // pred_check
        _
      $region30: #{tpu_custom_call.1} parent=5 // pred_check_branch
        %212 = sbr.rel (%p209) target = $region32
      $region31: #{tpu_custom_call.1} parent=5 // pred_region
        %s213 = ssub.s32 %s16, 1
        // Predicated region
        $region33: #{tpu_custom_call.1} parent=31 // pred_check
          %p214 = pneg %p56
        $region34: #{tpu_custom_call.1} parent=31 // pred_check_branch
          %216 = sbr.rel (%p214) target = $region36
        $region35: #{tpu_custom_call.1} parent=31 // pred_region
          %217 = dma.done [#allocation5], 16
        $region36: #{tpu_custom_call.1} parent=31 // pred_fallthru
          _
        %s218 = sand.u32 %s99, 1
        %s219 = scalar_lea.sflag [#allocation3], %s218
        %s220 = sand.u32 %s99, 1
        %s221 = smul.addr %s220, 64
        %s222 = scalar_lea.vmem [#allocation6], %s221
        // Predicated region
        $region37: #{tpu_custom_call.1} parent=31 // pred_check
          %p223 = pneg %p112
        $region38: #{tpu_custom_call.1} parent=31 // pred_check_branch
          %225 = sbr.rel (%p223) target = $region40
        $region39: #{tpu_custom_call.1} parent=31 // pred_region
          %226 = dma.done %s219, 1024
        $region40: #{tpu_custom_call.1} parent=31 // pred_fallthru
          _
        %227 = sfence
        %p228 = pneg %p56
        %p229 = pneg %p53
        %s230 = smul.u32 4, %s27
        %p231 = scmp.lt.s32.totalorder %s230, 3
        %s232 = scalar_select %p231, %s230, 3
        %s233 = smul.addr %s232, 8
        %s234 = scalar_lea.vmem %s1, %s233
        %p235 = pneg %p82
        %p236 = pneg %p79
        %s237 = sand.u32 %s99, 1
        %s238 = scalar_lea.sflag [#allocation3], %s237
        %s239 = sand.u32 %s99, 1
        %s240 = smul.addr %s239, 64
        %s241 = scalar_lea.vmem [#allocation6], %s240
        %p242 = pneg %p112
        %p243 = pneg %p109
        %p244 = pneg %p142
        %p245 = pneg %p139
        %s246 = sand.u32 %s129, 1
        %s247 = scalar_lea.sflag [#allocation4], %s246
        %s248 = sand.u32 %s129, 1
        %s249 = smul.addr %s248, 64
        %s250 = scalar_lea.vmem [#allocation7], %s249
        %s251 = smul.u32 4, %s27
        %p252 = scmp.lt.s32.totalorder %s251, 3
        %s253 = scalar_select %p252, %s251, 3
        %s254 = smul.addr %s253, 8
        %s255 = scalar_lea.vmem %s1, %s254
        %s256 = smul.u32 4, %s27
        %s257 = smul.u32 4, %s27
        %s258 = smul.u32 2, %s28
        %s259 = smul.u32 4, %s27
        %s260 = smul.u32 2, %s28
        %v261 = vld [vmem:[%s255] sm:$0xff]
        %v262 = vld [vmem:[%s255 + $0x8] sm:$0xff]
        %v263 = vld [vmem:[%s255 + $0x10] sm:$0xff]
        %v264 = vld [vmem:[%s255 + $0x18] sm:$0xff]
        %s265 = sld [smem:[#allocation2 + %s26]]
        %v266 = vstv %s265
        %v267 = vmul.f32 %v261, %v266
        %v268 = vmul.f32 %v262, %v266
        %v269 = vmul.f32 %v263, %v266
        %v270 = vmul.f32 %v264, %v266
        %v271 = vld [vmem:[%s222] sm:$0xff]
        %v272 = vld [vmem:[%s222 + $0x8] sm:$0xff]
        %v273 = vld [vmem:[%s222 + $0x10] sm:$0xff]
        %v274 = vld [vmem:[%s222 + $0x18] sm:$0xff]
        %v275 = vld [vmem:[%s222 + $0x20] sm:$0xff]
        %v276 = vld [vmem:[%s222 + $0x28] sm:$0xff]
        %v277 = vld [vmem:[%s222 + $0x30] sm:$0xff]
        %v278 = vld [vmem:[%s222 + $0x38] sm:$0xff]
        %280 = vset.pattern.permute.xlu0 0
        %281 = vperm.xlu0 %280, %v267
        %v282 = vpop.permute.xlu0 %281
        %285 = vset.pattern.permute.xlu0 0
        %286 = vperm.xlu0 %285, %v268
        %v287 = vpop.permute.xlu0 %286
        %290 = vset.pattern.permute.xlu0 0
        %291 = vperm.xlu0 %290, %v269
        %v292 = vpop.permute.xlu0 %291
        %295 = vset.pattern.permute.xlu0 0
        %296 = vperm.xlu0 %295, %v270
        %v297 = vpop.permute.xlu0 %296
        %v299 = vmul.f32 %v271, %v282
        %v300 = vmul.f32 %v272, %v282
        %v301 = vmul.f32 %v273, %v287
        %v302 = vmul.f32 %v274, %v287
        %v303 = vmul.f32 %v275, %v292
        %v304 = vmul.f32 %v276, %v292
        %v305 = vmul.f32 %v277, %v297
        %v306 = vmul.f32 %v278, %v297
        %307 = vst [vmem:[%s250] sm:$0xff] %v299
        %308 = vst [vmem:[%s250 + $0x8] sm:$0xff] %v300
        %309 = vst [vmem:[%s250 + $0x10] sm:$0xff] %v301
        %310 = vst [vmem:[%s250 + $0x18] sm:$0xff] %v302
        %311 = vst [vmem:[%s250 + $0x20] sm:$0xff] %v303
        %312 = vst [vmem:[%s250 + $0x28] sm:$0xff] %v304
        %313 = vst [vmem:[%s250 + $0x30] sm:$0xff] %v305
        %314 = vst [vmem:[%s250 + $0x38] sm:$0xff] %v306
        %s315 = sand.u32 %s129, 1
        %s316 = scalar_lea.sflag [#allocation4], %s315
        %s317 = sand.u32 %s129, 1
        %s318 = smul.addr %s317, 64
        %s319 = scalar_lea.vmem [#allocation7], %s318
        // Predicated region
        $region41: #{tpu_custom_call.1} parent=31 // pred_check
          %p320 = pneg %p139
        $region42: #{tpu_custom_call.1} parent=31 // pred_check_branch
          %322 = sbr.rel (%p320) target = $region44
        $region43: #{tpu_custom_call.1} parent=31 // pred_region
          %s323 = smul.u32 4, %s27
          %s324 = smul.u32 2, %s28
          %s326 = ssub.s32 1024, 1024
          %327 = vsyncadd %s316, %s326
          %s328 = smul.addr %s323, 2
          %s329 = sadd.s32 %s324, %s328
          %s330 = smul.addr %s26, 8
          %s331 = sadd.s32 %s329, %s330
          %s332 = smul.addr %s331, 128
          %s333 = scalar_lea.hbm %s3, %s332
          %s334 = sshll.u32 %s319, 4
          %s335 = int_to_ptr.vmem [resolvable:$true] %s334
          %340 = dma.vmem_to_hbm [thread:$0]  %s335, 1024, %s333, %s316, 256, 256, 16
        $region44: #{tpu_custom_call.1} parent=31 // pred_fallthru
          _
      $region32: #{tpu_custom_call.1} parent=5 // pred_fallthru
        _
      %p341 = scmp.le.s32.totalorder 2, %s16
      // Predicated region
      $region45: #{tpu_custom_call.1} parent=5 // pred_check
        %p342 = pneg %p341
      $region46: #{tpu_custom_call.1} parent=5 // pred_check_branch
        %344 = sbr.rel (%p342) target = $region48
      $region47: #{tpu_custom_call.1} parent=5 // pred_region
        %s345 = ssub.s32 %s16, 2
        // Predicated region
        $region49: #{tpu_custom_call.1} parent=47 // pred_check
          %p346 = pneg %p145
        $region50: #{tpu_custom_call.1} parent=47 // pred_check_branch
          %348 = sbr.rel (%p346) target = $region52
        $region51: #{tpu_custom_call.1} parent=47 // pred_region
          %s349 = sand.u32 %s130, 1
          %s350 = scalar_lea.sflag [#allocation4], %s349
          %s351 = sand.u32 %s130, 1
          %s352 = smul.addr %s351, 64
          %s353 = scalar_lea.vmem [#allocation7], %s352
          %354 = dma.done %s350, 1024
        $region52: #{tpu_custom_call.1} parent=47 // pred_fallthru
          _
      $region48: #{tpu_custom_call.1} parent=5 // pred_fallthru
        _
    $region6: #{tpu_custom_call.1} parent=1 // loop_footer
      %s20 = sadd.s32 1, %s16
    $region7: #{tpu_custom_call.1} parent=1 // loop_footer_branch
      %15 = sbr.rel target = $region3
    $region8: #{tpu_custom_call.1} parent=1 // loop_exit
      _
    %355 = vsyncpa [#allocation3], 1
    %s356 = scalar_lea.sflag [#allocation3], 1
    %357 = vsyncpa %s356, 1
    %358 = vsyncpa [#allocation4], 1
    %s359 = scalar_lea.sflag [#allocation4], 1
    %360 = vsyncpa %s359, 1
    %361 = vsyncpa [#allocation5], 1
    %s362 = scalar_lea.sflag [#allocation5], 1
    %363 = vsyncpa %s362, 1

</llo_original>
